<compile_context>
chip_gen: v7x
topology: tpu7x:2x2x1
jax: 0.10.0
libtpu: 0.0.40
codegen_flags: <defaults>
</compile_context>

<pallas_src>
import functools
import math

import jax
import jax.numpy as jnp
from jax.experimental import pallas as pl
from jax.experimental.pallas import tpu as pltpu

EPS = 1e-5
VMEM_LIMIT = 48 * 1024 * 1024   # safe on v7x (64 MiB phys) and v5e/v6e (128 MiB)


def _compiler_params():
    return pltpu.CompilerParams(dimension_semantics=("parallel",),
                                vmem_limit_bytes=VMEM_LIMIT)


# ------------------------- Pallas kernels -------------------------

def _mm_bias_kernel(x_ref, w_ref, b_ref, o_ref, *, relu6):
    """y = [relu6](x @ w + b); BN scale pre-folded into w."""
    y = jnp.dot(x_ref[...], w_ref[...], preferred_element_type=jnp.float32)
    y = y + b_ref[...]
    if relu6:
        y = jnp.clip(y, 0.0, 6.0)
    o_ref[...] = y.astype(o_ref.dtype)


def _ir_block_kernel(*refs, H, W, stride, expand, use_res):
    """Fused inverted-residual block for one batch element.

    expand 1x1 (+BN+ReLU6) -> depthwise 3x3 (+BN+ReLU6) -> project 1x1 (+BN)
    [+ residual].  The expanded hidden activation stays in VMEM scratch.
    """
    if expand:
        (x_ref, w1_ref, b1_ref, wd_ref, bd_ref, w2_ref, b2_ref,
         o_ref, pad_scr, dw_scr) = refs
    else:
        (x_ref, wd_ref, bd_ref, w2_ref, b2_ref,
         o_ref, pad_scr, dw_scr) = refs

    Ho = (H - 1) // stride + 1
    Wo = (W - 1) // stride + 1
    hidden = pad_scr.shape[-1]

    # Fresh zero halo every grid step (megacore-safe); interior is overwritten.
    pad_scr[...] = jnp.zeros(pad_scr.shape, pad_scr.dtype)

    x = x_ref[0]                                            # (H*W, Cin) bf16
    if expand:
        h = jnp.dot(x, w1_ref[...], preferred_element_type=jnp.float32)
        h = jnp.clip(h + b1_ref[...], 0.0, 6.0)             # expand + BN + ReLU6
    else:
        h = x.astype(jnp.float32)
    for i in range(H):                                      # fill halo'd scratch
        pad_scr[i + 1, 1:W + 1, :] = h[i * W:(i + 1) * W, :]

    wtaps = [wd_ref[t] for t in range(9)]                   # (1, hidden), BN-folded
    bd = bd_ref[...]                                        # (1, hidden)

    if stride == 2:
        # Column decimation as a one-hot matmul: keeps every load unit-stride.
        r_ids = jax.lax.broadcasted_iota(jnp.int32, (Wo, W), 0)
        c_ids = jax.lax.broadcasted_iota(jnp.int32, (Wo, W), 1)
        dec = (c_ids == 2 * r_ids).astype(jnp.float32)

    for i in range(Ho):                  # depthwise 3x3 + BN + ReLU6, row by row
        acc = jnp.zeros((W, hidden), jnp.float32)
        for kh in range(3):
            r = i * stride + kh
            for kw in range(3):
                acc = acc + pad_scr[r, kw:kw + W, :] * wtaps[kh * 3 + kw]
        if stride == 2:
            acc = jnp.dot(dec, acc, preferred_element_type=jnp.float32)
        dw_scr[i * Wo:(i + 1) * Wo, :] = jnp.clip(acc + bd, 0.0, 6.0)

    # project 1x1 + BN (+ residual); hidden never leaves VMEM
    y = jnp.dot(dw_scr[...].astype(jnp.bfloat16), w2_ref[...],
                preferred_element_type=jnp.float32) + b2_ref[...]
    if use_res:
        y = y + x.astype(jnp.float32)
    o_ref[0] = y.astype(o_ref.dtype)


def _head_kernel(x_ref, wh_ref, bh_ref, wc_ref, bc_ref, o_ref):
    """Fused conv_1x1_bn(320->1280) + ReLU6 + global mean + Linear classifier."""
    x = x_ref[0]                                            # (HW, Cin) bf16
    y = jnp.dot(x, wh_ref[...], preferred_element_type=jnp.float32)
    y = jnp.clip(y + bh_ref[...], 0.0, 6.0)
    m = jnp.mean(y, axis=0, keepdims=True)                  # (1, 1280)
    o_ref[0] = (jnp.dot(m, wc_ref[...], preferred_element_type=jnp.float32)
                + bc_ref[...])


# ------------------------- kernel wrappers -------------------------

def _pick_tile(M):
    """Largest row tile (<=512, multiple of 8) that still gives >=2 grid steps."""
    for t in (512, 256, 128, 64, 32, 16, 8):
        if M % t == 0 and M // t >= 2:
            return t
    return M


def matmul_bias(x, w, b, *, relu6, out_dtype):
    M, K = x.shape
    Nc = w.shape[1]
    TM = _pick_tile(M)
    return pl.pallas_call(
        functools.partial(_mm_bias_kernel, relu6=relu6),
        out_shape=jax.ShapeDtypeStruct((M, Nc), out_dtype),
        grid=(M // TM,),
        in_specs=[pl.BlockSpec((TM, K), lambda i: (i, 0)),
                  pl.BlockSpec((K, Nc), lambda i: (0, 0)),
                  pl.BlockSpec((1, Nc), lambda i: (0, 0))],
        out_specs=pl.BlockSpec((TM, Nc), lambda i: (i, 0)),
        compiler_params=_compiler_params(),
    )(x, w, b)


def ir_block(x, blk, H, W):
    N, HW, Cin = x.shape
    stride, expand, use_res = blk['stride'], blk['expand'], blk['use_res']
    hidden, Cout = blk['hidden'], blk['cout']
    Ho = (H - 1) // stride + 1
    Wo = (W - 1) // stride + 1

    args = [x]
    in_specs = [pl.BlockSpec((1, HW, Cin), lambda n: (n, 0, 0))]
    if expand:
        args += [blk['pw1_w'], blk['pw1_b']]
        in_specs += [pl.BlockSpec((Cin, hidden), lambda n: (0, 0)),
                     pl.BlockSpec((1, hidden), lambda n: (0, 0))]
    args += [blk['dw_w'], blk['dw_b'], blk['pw2_w'], blk['pw2_b']]
    in_specs += [pl.BlockSpec((9, 1, hidden), lambda n: (0, 0, 0)),
                 pl.BlockSpec((1, hidden), lambda n: (0, 0)),
                 pl.BlockSpec((hidden, Cout), lambda n: (0, 0)),
                 pl.BlockSpec((1, Cout), lambda n: (0, 0))]

    out = pl.pallas_call(
        functools.partial(_ir_block_kernel, H=H, W=W, stride=stride,
                          expand=expand, use_res=use_res),
        out_shape=jax.ShapeDtypeStruct((N, Ho * Wo, Cout), jnp.bfloat16),
        grid=(N,),
        in_specs=in_specs,
        out_specs=pl.BlockSpec((1, Ho * Wo, Cout), lambda n: (n, 0, 0)),
        scratch_shapes=[pltpu.VMEM((H + 2, W + 2, hidden), jnp.float32),
                        pltpu.VMEM((Ho * Wo, hidden), jnp.float32)],
        compiler_params=_compiler_params(),
    )(*args)
    return out, Ho, Wo


def head_classifier(x, head_w, head_b, cls_w, cls_b, HW):
    N, _, Cin = x.shape
    Chead = head_w.shape[1]
    n_class = cls_w.shape[1]
    out = pl.pallas_call(
        _head_kernel,
        out_shape=jax.ShapeDtypeStruct((N, 1, n_class), jnp.float32),
        grid=(N,),
        in_specs=[pl.BlockSpec((1, HW, Cin), lambda n: (n, 0, 0)),
                  pl.BlockSpec((Cin, Chead), lambda n: (0, 0)),
                  pl.BlockSpec((1, Chead), lambda n: (0, 0)),
                  pl.BlockSpec((Chead, n_class), lambda n: (0, 0)),
                  pl.BlockSpec((1, n_class), lambda n: (0, 0))],
        out_specs=pl.BlockSpec((1, 1, n_class), lambda n: (n, 0, 0)),
        compiler_params=_compiler_params(),
    )(x, head_w, head_b, cls_w, cls_b)
    return out.reshape(N, n_class)


# ------------------------- JAX glue (stem im2col, tiny) -------------------------

def extract_taps(x, stride):
    N, H, W, C = x.shape
    xp = jnp.pad(x, ((0, 0), (1, 1), (1, 1), (0, 0)))
    Ho = (H - 1) // stride + 1
    Wo = (W - 1) // stride + 1
    taps = []
    for kh in range(3):
        for kw in range(3):
            taps.append(jax.lax.slice(
                xp, (0, kh, kw, 0),
                (N, kh + (Ho - 1) * stride + 1, kw + (Wo - 1) * stride + 1, C),
                (1, stride, stride, 1)))
    return jnp.stack(taps, axis=0), Ho, Wo


def conv_stem(x_nhwc, w, b):
    N, _, _, C = x_nhwc.shape
    taps, Ho, Wo = extract_taps(x_nhwc, 2)
    patches = jnp.transpose(taps, (1, 2, 3, 0, 4)).reshape(N * Ho * Wo, 9 * C)
    y = matmul_bias(patches.astype(jnp.bfloat16), w, b,
                    relu6=True, out_dtype=jnp.bfloat16)
    return y.reshape(N, Ho * Wo, -1), Ho, Wo


# ------------------------- parameters (deterministic init) -------------------------

def make_divisible(v, divisor=8):
    return int(math.ceil(v / divisor) * divisor)


def _bn_fold(c):
    gamma = jnp.ones((c,), jnp.float32)
    beta = jnp.zeros((c,), jnp.float32)
    mean = jnp.zeros((c,), jnp.float32)
    var = jnp.ones((c,), jnp.float32)
    scale = gamma / jnp.sqrt(var + EPS)
    bias = beta - mean * scale
    return scale, bias


def init_params(key, n_class=10, width_mult=1.0):
    keys = iter(jax.random.split(key, 64))

    def conv_w(shape, fan):   # normal(0, sqrt(2/n)), torch Conv2d layout (O, I, kh, kw)
        return jax.random.normal(next(keys), shape, jnp.float32) * math.sqrt(2.0 / fan)

    input_channel = 32
    last_channel = 1280

    # stem: conv_bn(3, 32, stride=2)   (BN scale folded into weight columns)
    w = conv_w((input_channel, 3, 3, 3), 3 * 3 * input_channel)
    sc, bi = _bn_fold(input_channel)
    stem_w = (jnp.transpose(w, (2, 3, 1, 0)).reshape(9 * 3, input_channel)
              * sc[None, :]).astype(jnp.bfloat16)
    stem_b = bi.reshape(1, input_channel)

    settings = [[1, 16, 1, 1], [6, 24, 2, 2], [6, 32, 3, 2], [6, 64, 4, 2],
                [6, 96, 3, 1], [6, 160, 3, 2], [6, 320, 1, 1]]
    blocks = []
    for t, c, n, s_ in settings:
        output_channel = make_divisible(c * width_mult) if t > 1 else c
        for i in range(n):
            stride = s_ if i == 0 else 1
            inp, oup = input_channel, output_channel
            hidden = int(inp * t)
            blk = dict(stride=stride, expand=(t != 1),
                       use_res=(stride == 1 and inp == oup),
                       hidden=hidden, cin=inp, cout=oup)
            if t != 1:
                w1 = conv_w((hidden, inp, 1, 1), 1 * 1 * hidden)
                s1, b1 = _bn_fold(hidden)
                blk['pw1_w'] = (w1[:, :, 0, 0].T * s1[None, :]).astype(jnp.bfloat16)
                blk['pw1_b'] = b1.reshape(1, hidden)
            wd = conv_w((hidden, 1, 3, 3), 3 * 3 * hidden)
            sd, bd = _bn_fold(hidden)
            blk['dw_w'] = (jnp.transpose(wd[:, 0], (1, 2, 0)).reshape(9, 1, hidden)
                           * sd.reshape(1, 1, hidden))
            blk['dw_b'] = bd.reshape(1, hidden)
            w2 = conv_w((oup, hidden, 1, 1), 1 * 1 * oup)
            s2, b2 = _bn_fold(oup)
            blk['pw2_w'] = (w2[:, :, 0, 0].T * s2[None, :]).astype(jnp.bfloat16)
            blk['pw2_b'] = b2.reshape(1, oup)
            blocks.append(blk)
            input_channel = output_channel

    # head: conv_1x1_bn(input_channel, 1280)
    wl = conv_w((last_channel, input_channel, 1, 1), 1 * 1 * last_channel)
    sl, bl = _bn_fold(last_channel)
    head_w = (wl[:, :, 0, 0].T * sl[None, :]).astype(jnp.bfloat16)
    head_b = bl.reshape(1, last_channel)

    # classifier: Linear(1280, n_class), weight ~ N(0, 0.01), bias = 0 (kept f32)
    w_fc = jax.random.normal(next(keys), (n_class, last_channel), jnp.float32) * 0.01
    cls_w = w_fc.T
    cls_b = jnp.zeros((1, n_class), jnp.float32)

    return dict(stem_w=stem_w, stem_b=stem_b, blocks=blocks,
                head_w=head_w, head_b=head_b, cls_w=cls_w, cls_b=cls_b)


# ------------------------- forward -------------------------

def mobilenet_v2_forward(params, x_nchw):
    x_nhwc = jnp.transpose(x_nchw, (0, 2, 3, 1)).astype(jnp.float32)   # NCHW -> NHWC
    x, H, W = conv_stem(x_nhwc, params['stem_w'], params['stem_b'])
    for blk in params['blocks']:
        x, H, W = ir_block(x, blk, H, W)
    return head_classifier(x, params['head_w'], params['head_b'],
                           params['cls_w'], params['cls_b'], H * W)


if __name__ == "__main__":
    key = jax.random.PRNGKey(0)
    pkey, xkey = jax.random.split(key)
    n_class = 10
    params = init_params(pkey, n_class=n_class, width_mult=1.0)
    # input_size must be divisible by 32 -> smallest valid spatial size is 32
    x = jax.random.normal(xkey, (2, 3, 32, 32), jnp.float32)   # NCHW like PyTorch
    out = mobilenet_v2_forward(params, x)
    out = jax.block_until_ready(out)
    assert out.shape == (2, n_class)
    assert bool(jnp.all(jnp.isfinite(out)))
    print("KERNEL_OK")
</pallas_src>

<mosaic_0001>
module attributes {stable_mosaic.version = 11 : i64} {
  func.func @_mm_bias_kernel(%arg0: i32, %arg1: memref<256x27xbf16, #tpu.memory_space<vmem>>, %arg2: memref<27x32xbf16, #tpu.memory_space<vmem>>, %arg3: memref<1x32xf32, #tpu.memory_space<vmem>>, %arg4: memref<256x32xbf16, #tpu.memory_space<vmem>>) attributes {dimension_semantics = [#tpu.dimension_semantics<parallel>], iteration_bounds = array<i64: 2>, scalar_prefetch = 0 : i64, scratch_operands = 0 : i64, tpu.core_type = #tpu.core_type<tc>, window_params = [{transform_indices = @transform_0, window_bounds = array<i64: 256, 27>}, {pipeline_mode = #tpu.pipeline_mode<synchronous>, transform_indices = @transform_1, window_bounds = array<i64: 27, 32>}, {pipeline_mode = #tpu.pipeline_mode<synchronous>, transform_indices = @transform_2, window_bounds = array<i64: 1, 32>}, {transform_indices = @transform_3, window_bounds = array<i64: 256, 32>}]} {
    %c0 = arith.constant 0 : index
    %c0_0 = arith.constant 0 : index
    %0 = vector.load %arg1[%c0, %c0_0] : memref<256x27xbf16, #tpu.memory_space<vmem>>, vector<256x27xbf16>
    %c0_1 = arith.constant 0 : index
    %c0_2 = arith.constant 0 : index
    %1 = vector.load %arg2[%c0_1, %c0_2] : memref<27x32xbf16, #tpu.memory_space<vmem>>, vector<27x32xbf16>
    %cst = arith.constant dense<0.000000e+00> : vector<256x32xf32>
    %2 = tpu.matmul %0, %1, %cst {dimension_numbers = #tpu.dot_dimension_numbers<[1], [0], [0], [1], [0, 0, 1, 1], [], []>} : vector<256x27xbf16>, vector<27x32xbf16>, vector<256x32xf32> -> vector<256x32xf32>
    %c0_3 = arith.constant 0 : index
    %c0_4 = arith.constant 0 : index
    %3 = vector.load %arg3[%c0_3, %c0_4] : memref<1x32xf32, #tpu.memory_space<vmem>>, vector<1x32xf32>
    %4 = vector.broadcast %3 : vector<1x32xf32> to vector<256x32xf32>
    %5 = arith.addf %2, %4 : vector<256x32xf32>
    %cst_5 = arith.constant 0.000000e+00 : f32
    %cst_6 = arith.constant 6.000000e+00 : f32
    %6 = vector.broadcast %cst_5 : f32 to vector<256x32xf32>
    %7 = arith.maximumf %6, %5 : vector<256x32xf32>
    %8 = vector.broadcast %cst_6 : f32 to vector<256x32xf32>
    %9 = arith.minimumf %8, %7 : vector<256x32xf32>
    %10 = arith.truncf %9 : vector<256x32xf32> to vector<256x32xbf16>
    %c0_7 = arith.constant 0 : index
    %c0_8 = arith.constant 0 : index
    %11 = vector.load %arg4[%c0_7, %c0_8] : memref<256x32xbf16, #tpu.memory_space<vmem>>, vector<256x32xbf16>
    tpu.vector_store %arg4[%c0_7, %c0_8], %10 {strides = array<i32>} : memref<256x32xbf16, #tpu.memory_space<vmem>>, vector<256x32xbf16>,
    return
  }
  func.func @transform_0(%arg0: i32) -> (i32, i32) {
    %c0_i32 = arith.constant 0 : i32
    %c0_i32_0 = arith.constant 0 : i32
    return %arg0, %c0_i32 : i32, i32
  }
  func.func @transform_1(%arg0: i32) -> (i32, i32) {
    %c0_i32 = arith.constant 0 : i32
    %c0_i32_0 = arith.constant 0 : i32
    %c0_i32_1 = arith.constant 0 : i32
    return %c0_i32, %c0_i32_0 : i32, i32
  }
  func.func @transform_2(%arg0: i32) -> (i32, i32) {
    %c0_i32 = arith.constant 0 : i32
    %c0_i32_0 = arith.constant 0 : i32
    %c0_i32_1 = arith.constant 0 : i32
    return %c0_i32, %c0_i32_0 : i32, i32
  }
  func.func @transform_3(%arg0: i32) -> (i32, i32) {
    %c0_i32 = arith.constant 0 : i32
    %c0_i32_0 = arith.constant 0 : i32
    return %arg0, %c0_i32 : i32, i32
  }
}

</mosaic_0001>

<llo_original>
// kernel: tpu_custom_call.1
$region0: #{tpu_custom_call.1}
  #allocation0 [shape = 'u32[]', space=smem, size = 0x4, offset = 0x4, fixed_abs, tag = 'smem constant byte address 0x4 - core index']
  #allocation1 [shape = 'u32[144,128]{1,0:T(1,128)}', space=vmem, size = 0x12000, scoped, tag = 'internal scratch']
  %s0 = inlined_call_operand.vmem [shape: bf16[512,27], index: 0, kind: input, shape index: {}]
  %s1 = inlined_call_operand.vmem [shape: bf16[27,32], index: 1, kind: input, shape index: {}]
  %s2 = inlined_call_operand.vmem [shape: f32[1,32], index: 2, kind: input, shape index: {}]
  %s3 = inlined_call_operand.vmem [shape: bf16[512,32], index: 3, kind: output, shape index: {}]
  %s4 = sld [smem:[#allocation0]]
  $region45: #{tpu_custom_call.1} parent=0
    _
  %s6 = ssub.s32 1, %s4
  %s7 = scalar_select 0, %s6, %s4
  loop: start=0, step=1, limit=4
  $region2: #{tpu_custom_call.1} parent=0 // loop_pre_header
    _
  $region3: #{tpu_custom_call.1} parent=0 // loop_header
    %s9 = sphi 0, %s13
    %p10 = scmp.ge.s32.totalorder %s9, 4
    %s19 = sphi 0, %s21
    %s22 = sphi 0, %s19
    %s23 = sphi 0, %s22
    %s39 = sphi 0, %s23
    %s43 = sphi 0, %s43
    %s45 = sphi 0, %s43
    %s46 = sphi 0, %s45
    %s60 = sphi 0, %s46
    %s64 = sphi 0, %s64
    %s66 = sphi 0, %s64
    %s67 = sphi 0, %s66
    %s81 = sphi 0, %s67
    %s87 = sphi 0, %s89
    %s90 = sphi 0, %s87
    %s91 = sphi 0, %s90
    %s107 = sphi 0, %s91
  $region4: #{tpu_custom_call.1} parent=0 // loop_header_branch
    %12 = sbr.rel (%p10) target = $region8
  $region5: #{tpu_custom_call.1} parent=0 // loop_body
    %s14 = ssub.s32 %s9, 1
    %s15 = ssub.s32 %s9, 2
    %s16 = sadd.s32 %s9, 1
    %s17 = ssub.s32 %s9, %s16
    %p18 = scmp.eq.s32.totalorder %s17, 0
    %s20 = sadd.s32 %s19, 1
    %s21 = scalar_select %p18, %s19, %s20
    %p24 = pneg %p18
    %p25 = scmp.eq.s32.totalorder %s9, 1
    %p26 = por %p24, %p25
    %p27 = scmp.ne.s32.totalorder %s19, %s22
    %p28 = scmp.eq.s32.totalorder %s9, 0
    %p29 = por %p27, %p28
    %p30 = scmp.ne.s32.totalorder %s19, %s22
    %p31 = scmp.eq.s32.totalorder %s14, 1
    %p32 = por %p30, %p31
    %p33 = scmp.ne.s32.totalorder %s22, %s23
    %p34 = scmp.eq.s32.totalorder %s14, 0
    %p35 = por %p33, %p34
    %p36 = scmp.ne.s32.totalorder %s22, %s23
    %p37 = scmp.eq.s32.totalorder %s15, 1
    %p38 = por %p36, %p37
    %p40 = scmp.ne.s32.totalorder %s23, %s39
    %p41 = scmp.eq.s32.totalorder %s15, 0
    %p42 = por %p40, %p41
    %s44 = sadd.s32 %s43, 1
    %p47 = scmp.eq.s32.totalorder %s9, 1
    %p48 = scmp.ne.s32.totalorder %s43, %s45
    %p49 = scmp.eq.s32.totalorder %s9, 0
    %p50 = por %p48, %p49
    %p51 = scmp.ne.s32.totalorder %s43, %s45
    %p52 = scmp.eq.s32.totalorder %s14, 1
    %p53 = por %p51, %p52
    %p54 = scmp.ne.s32.totalorder %s45, %s46
    %p55 = scmp.eq.s32.totalorder %s14, 0
    %p56 = por %p54, %p55
    %p57 = scmp.ne.s32.totalorder %s45, %s46
    %p58 = scmp.eq.s32.totalorder %s15, 1
    %p59 = por %p57, %p58
    %p61 = scmp.ne.s32.totalorder %s46, %s60
    %p62 = scmp.eq.s32.totalorder %s15, 0
    %p63 = por %p61, %p62
    %s65 = sadd.s32 %s64, 1
    %p68 = scmp.eq.s32.totalorder %s9, 1
    %p69 = scmp.ne.s32.totalorder %s64, %s66
    %p70 = scmp.eq.s32.totalorder %s9, 0
    %p71 = por %p69, %p70
    %p72 = scmp.ne.s32.totalorder %s64, %s66
    %p73 = scmp.eq.s32.totalorder %s14, 1
    %p74 = por %p72, %p73
    %p75 = scmp.ne.s32.totalorder %s66, %s67
    %p76 = scmp.eq.s32.totalorder %s14, 0
    %p77 = por %p75, %p76
    %p78 = scmp.ne.s32.totalorder %s66, %s67
    %p79 = scmp.eq.s32.totalorder %s15, 1
    %p80 = por %p78, %p79
    %p82 = scmp.ne.s32.totalorder %s67, %s81
    %p83 = scmp.eq.s32.totalorder %s15, 0
    %p84 = por %p82, %p83
    %s85 = ssub.s32 %s9, %s16
    %p86 = scmp.eq.s32.totalorder %s85, 0
    %s88 = sadd.s32 %s87, 1
    %s89 = scalar_select %p86, %s87, %s88
    %p92 = pneg %p86
    %p93 = scmp.eq.s32.totalorder %s9, 1
    %p94 = por %p92, %p93
    %p95 = scmp.ne.s32.totalorder %s87, %s90
    %p96 = scmp.eq.s32.totalorder %s9, 0
    %p97 = por %p95, %p96
    %p98 = scmp.ne.s32.totalorder %s87, %s90
    %p99 = scmp.eq.s32.totalorder %s14, 1
    %p100 = por %p98, %p99
    %p101 = scmp.ne.s32.totalorder %s90, %s91
    %p102 = scmp.eq.s32.totalorder %s14, 0
    %p103 = por %p101, %p102
    %p104 = scmp.ne.s32.totalorder %s90, %s91
    %p105 = scmp.eq.s32.totalorder %s15, 1
    %p106 = por %p104, %p105
    %p108 = scmp.ne.s32.totalorder %s91, %s107
    %p109 = scmp.eq.s32.totalorder %s15, 0
    %p110 = por %p108, %p109
    %p111 = scmp.le.s32.totalorder 1, %s9
    %p112 = scmp.lt.s32.totalorder %s9, 3
    %p113 = pnand %p111, %p112
    %p114 = pneg %p113
    // Predicated region
    $region9: #{tpu_custom_call.1} parent=5 // pred_check
      _
    $region10: #{tpu_custom_call.1} parent=5 // pred_check_branch
      %116 = sbr.rel (%p113) target = $region12
    $region11: #{tpu_custom_call.1} parent=5 // pred_region
      %s117 = ssub.s32 %s9, 1
      // Predicated region
      $region13: #{tpu_custom_call.1} parent=11 // pred_check
        %p118 = pneg %p56
      $region14: #{tpu_custom_call.1} parent=11 // pred_check_branch
        %120 = sbr.rel (%p118) target = $region16
      $region15: #{tpu_custom_call.1} parent=11 // pred_region
        _
      $region16: #{tpu_custom_call.1} parent=11 // pred_fallthru
        _
      // Predicated region
      $region17: #{tpu_custom_call.1} parent=11 // pred_check
        %p121 = pneg %p77
      $region18: #{tpu_custom_call.1} parent=11 // pred_check_branch
        %123 = sbr.rel (%p121) target = $region20
      $region19: #{tpu_custom_call.1} parent=11 // pred_region
        _
      $region20: #{tpu_custom_call.1} parent=11 // pred_fallthru
        _
    $region12: #{tpu_custom_call.1} parent=5 // pred_fallthru
      _
    %p124 = scmp.lt.s32.totalorder %s9, 2
    // Predicated region
    $region21: #{tpu_custom_call.1} parent=5 // pred_check
      %p125 = pneg %p124
    $region22: #{tpu_custom_call.1} parent=5 // pred_check_branch
      %127 = sbr.rel (%p125) target = $region24
    $region23: #{tpu_custom_call.1} parent=5 // pred_region
      // Predicated region
      $region25: #{tpu_custom_call.1} parent=23 // pred_check
        %p128 = pneg %p29
      $region26: #{tpu_custom_call.1} parent=23 // pred_check_branch
        %130 = sbr.rel (%p128) target = $region28
      $region27: #{tpu_custom_call.1} parent=23 // pred_region
        %s131 = smul.u32 32, %s9
        %p132 = scmp.lt.s32.totalorder %s131, 63
        %s133 = scalar_select %p132, %s131, 63
        %s134 = smul.addr %s133, 4
        %s135 = scalar_lea.vmem %s0, %s134
        %s136 = smul.u32 32, %s9
      $region28: #{tpu_custom_call.1} parent=23 // pred_fallthru
        _
    $region24: #{tpu_custom_call.1} parent=5 // pred_fallthru
      _
    %p137 = scmp.le.s32.totalorder 1, %s9
    %p138 = scmp.lt.s32.totalorder %s9, 3
    %p139 = pnand %p137, %p138
    %p140 = pneg %p139
    // Predicated region
    $region29: #{tpu_custom_call.1} parent=5 // pred_check
      _
    $region30: #{tpu_custom_call.1} parent=5 // pred_check_branch
      %142 = sbr.rel (%p139) target = $region32
    $region31: #{tpu_custom_call.1} parent=5 // pred_region
      %s143 = ssub.s32 %s9, 1
      %s144 = smul.u32 32, %s14
      %p145 = scmp.lt.s32.totalorder %s144, 63
      %s146 = scalar_select %p145, %s144, 63
      %s147 = smul.addr %s146, 4
      %s148 = scalar_lea.vmem %s0, %s147
      %p149 = pneg %p35
      %p150 = pneg %p32
      %p151 = pneg %p56
      %p152 = pneg %p53
      %p153 = pneg %p77
      %p154 = pneg %p74
      %p155 = pneg %p103
      %p156 = pneg %p100
      %s157 = smul.u32 32, %s14
      %p158 = scmp.lt.s32.totalorder %s157, 63
      %s159 = scalar_select %p158, %s157, 63
      %s160 = smul.addr %s159, 4
      %s161 = scalar_lea.vmem %s3, %s160
      %s162 = smul.u32 32, %s14
      %p163 = scmp.lt.s32.totalorder %s162, 63
      %s164 = scalar_select %p163, %s162, 63
      %s165 = smul.addr %s164, 4
      %s166 = scalar_lea.vmem %s0, %s165
      %s167 = smul.u32 32, %s14
      %s168 = smul.u32 32, %s14
      %p169 = scmp.lt.s32.totalorder %s168, 63
      %s170 = scalar_select %p169, %s168, 63
      %s171 = smul.addr %s170, 4
      %s172 = scalar_lea.vmem %s3, %s171
      %s173 = smul.u32 32, %s14
      %v175 = vld [vmem:[%s166] sm:$0xf]
      %v176 = vld [vmem:[%s166 + $0x4] sm:$0xf]
      %v177 = vld [vmem:[%s166 + $0x8] sm:$0xf]
      %v178 = vld [vmem:[%s166 + $0xc] sm:$0xf]
      %v179 = vld [vmem:[%s166 + $0x10] sm:$0xf]
      %v180 = vld [vmem:[%s166 + $0x14] sm:$0xf]
      %v181 = vld [vmem:[%s166 + $0x18] sm:$0xf]
      %v182 = vld [vmem:[%s166 + $0x1c] sm:$0xf]
      %v183 = vld [vmem:[%s166 + $0x20] sm:$0xf]
      %v184 = vld [vmem:[%s166 + $0x24] sm:$0xf]
      %v185 = vld [vmem:[%s166 + $0x28] sm:$0xf]
      %v186 = vld [vmem:[%s166 + $0x2c] sm:$0xf]
      %v187 = vld [vmem:[%s166 + $0x30] sm:$0xf]
      %v188 = vld [vmem:[%s166 + $0x34] sm:$0xf]
      %v189 = vld [vmem:[%s166 + $0x38] sm:$0xf]
      %v190 = vld [vmem:[%s166 + $0x3c] sm:$0xf]
      %v191 = vld [vmem:[%s166 + $0x40] sm:$0xf]
      %v192 = vld [vmem:[%s166 + $0x44] sm:$0xf]
      %v193 = vld [vmem:[%s166 + $0x48] sm:$0xf]
      %v194 = vld [vmem:[%s166 + $0x4c] sm:$0xf]
      %v195 = vld [vmem:[%s166 + $0x50] sm:$0xf]
      %v196 = vld [vmem:[%s166 + $0x54] sm:$0xf]
      %v197 = vld [vmem:[%s166 + $0x58] sm:$0xf]
      %v198 = vld [vmem:[%s166 + $0x5c] sm:$0xf]
      %v199 = vld [vmem:[%s166 + $0x60] sm:$0xf]
      %v200 = vld [vmem:[%s166 + $0x64] sm:$0xf]
      %v201 = vld [vmem:[%s166 + $0x68] sm:$0xf]
      %v202 = vld [vmem:[%s166 + $0x6c] sm:$0xf]
      %v203 = vld [vmem:[%s166 + $0x70] sm:$0xf]
      %v204 = vld [vmem:[%s166 + $0x74] sm:$0xf]
      %v205 = vld [vmem:[%s166 + $0x78] sm:$0xf]
      %v206 = vld [vmem:[%s166 + $0x7c] sm:$0xf]
      %v207 = vld [vmem:[%s1] sm:$0xf]
      %v208 = vld [vmem:[%s1 + $0x4] sm:$0xf]
      %v209 = vld [vmem:[%s1 + $0x8] sm:$0xf]
      %v210 = vld [vmem:[%s1 + $0xc] sm:$0x3]
      %v211 = vld [vmem:[%s2] sm:$0x1]
      %v213 = vlaneseq
      %v214 = vshrl.u32 %v213, 7
      %v215 = vsub.s32 0, %v214
      %v216 = vrot.slane %v211, %v215
      %v250 = vunpack.c.l.b16 %v175
      %v251 = vunpack.c.l.b16 %v176
      %v252 = vunpack.c.l.b16 %v177
      %v253 = vunpack.c.l.b16 %v178
      %v254 = vunpack.c.l.b16 %v179
      %v255 = vunpack.c.l.b16 %v180
      %v256 = vunpack.c.l.b16 %v181
      %v257 = vunpack.c.l.b16 %v182
      %v258 = vunpack.c.l.b16 %v183
      %v259 = vunpack.c.l.b16 %v184
      %v260 = vunpack.c.l.b16 %v185
      %v261 = vunpack.c.l.b16 %v186
      %v262 = vunpack.c.l.b16 %v187
      %v263 = vunpack.c.l.b16 %v188
      %v264 = vunpack.c.l.b16 %v189
      %v265 = vunpack.c.l.b16 %v190
      %v266 = vunpack.c.l.b16 %v191
      %v267 = vunpack.c.l.b16 %v192
      %v268 = vunpack.c.l.b16 %v193
      %v269 = vunpack.c.l.b16 %v194
      %v270 = vunpack.c.l.b16 %v195
      %v271 = vunpack.c.l.b16 %v196
      %v272 = vunpack.c.l.b16 %v197
      %v273 = vunpack.c.l.b16 %v198
      %v274 = vunpack.c.l.b16 %v199
      %v275 = vunpack.c.l.b16 %v200
      %v276 = vunpack.c.l.b16 %v201
      %v277 = vunpack.c.l.b16 %v202
      %v278 = vunpack.c.l.b16 %v203
      %v279 = vunpack.c.l.b16 %v204
      %v280 = vunpack.c.l.b16 %v205
      %v281 = vunpack.c.l.b16 %v206
      %v282 = vpack.c.b16 %v251, %v250
      %v283 = vpack.c.b16 %v253, %v252
      %v284 = vpack.c.b16 %v255, %v254
      %v285 = vpack.c.b16 %v257, %v256
      %v286 = vpack.c.b16 %v259, %v258
      %v287 = vpack.c.b16 %v261, %v260
      %v288 = vpack.c.b16 %v263, %v262
      %v289 = vpack.c.b16 %v265, %v264
      %v290 = vpack.c.b16 %v267, %v266
      %v291 = vpack.c.b16 %v269, %v268
      %v292 = vpack.c.b16 %v271, %v270
      %v293 = vpack.c.b16 %v273, %v272
      %v294 = vpack.c.b16 %v275, %v274
      %v295 = vpack.c.b16 %v277, %v276
      %v296 = vpack.c.b16 %v279, %v278
      %v297 = vpack.c.b16 %v281, %v280
      %v302 = vunpack.c.l.b16 %v207
      %v303 = vunpack.c.l.b16 %v208
      %v304 = vunpack.c.l.b16 %v209
      %v305 = vunpack.c.l.b16 %v210
      %v306 = vpack.c.b16 %v303, %v302
      %v307 = vpack.c.b16 %v305, %v304
      %vm309 = vcmask 220160
      %v311 = vsel %vm309, %v282, 0
      %v314 = vsel %vm309, %v283, 0
      %v317 = vsel %vm309, %v284, 0
      %v320 = vsel %vm309, %v285, 0
      %v323 = vsel %vm309, %v286, 0
      %v326 = vsel %vm309, %v287, 0
      %v329 = vsel %vm309, %v288, 0
      %v332 = vsel %vm309, %v289, 0
      %v335 = vsel %vm309, %v290, 0
      %v338 = vsel %vm309, %v291, 0
      %v341 = vsel %vm309, %v292, 0
      %v344 = vsel %vm309, %v293, 0
      %v347 = vsel %vm309, %v294, 0
      %v350 = vsel %vm309, %v295, 0
      %v353 = vsel %vm309, %v296, 0
      %v356 = vsel %vm309, %v297, 0
      %vm358 = vcmask 1044480
      %vm359 = vcmask 1045504
      %v360 = vsel %vm358, 4294967295, 65535
      %v361 = vsel %vm359, %v360, 0
      %v363 = vand.u32 %v307, %v361
      %365 = vmatprep.subr.bf16.mxu0 0
      %366 = vmatpush1.bf16.msra.mxu0 %v306
      %367 = vmatprep.subr.bf16.mxu0 0
      %368 = vmatpush1.bf16.msra.mxu0 %v363
      %369 = vmatprep.subr.bf16.mxu0 0
      %370 = vmatpush1.bf16.msra.mxu0 0
      %371 = vmatprep.subr.bf16.mxu0 0
      %372 = vmatpush1.bf16.msra.mxu0 0
      %373 = vmatprep.subr.bf16.mxu0 0
      %374 = vmatpush1.bf16.msra.mxu0 0
      %375 = vmatprep.subr.bf16.mxu0 0
      %376 = vmatpush1.bf16.msra.mxu0 0
      %377 = vmatprep.subr.bf16.mxu0 0
      %378 = vmatpush1.bf16.msra.mxu0 0
      %379 = vmatprep.subr.bf16.mxu0 0
      %380 = vmatpush1.bf16.msra.mxu0 0
      %381 = vmatprep.subr.bf16.mxu0 0
      %382 = vmatpush1.bf16.msra.mxu0 0
      %383 = vmatprep.subr.bf16.mxu0 0
      %384 = vmatpush1.bf16.msra.mxu0 0
      %385 = vmatprep.subr.bf16.mxu0 0
      %386 = vmatpush1.bf16.msra.mxu0 0
      %387 = vmatprep.subr.bf16.mxu0 0
      %388 = vmatpush1.bf16.msra.mxu0 0
      %389 = vmatprep.subr.bf16.mxu0 0
      %390 = vmatpush1.bf16.msra.mxu0 0
      %391 = vmatprep.subr.bf16.mxu0 0
      %392 = vmatpush1.bf16.msra.mxu0 0
      %393 = vmatprep.subr.bf16.mxu0 0
      %394 = vmatpush1.bf16.msra.mxu0 0
      %395 = vmatprep.subr.bf16.mxu0 0
      %396 = vmatpush1.bf16.msra.mxu0 0
      %397 = vmatprep.mubr.bf16.mxu0 0
      %398 = vmatmul.mubr.bf16.gmra.mrb[0].mxu0 %v311
      %v399 = vpop.f32.mrb[0].mxu0
      %v400 = vadd.f32 %v216, %v399
      %v401 = vpop.f32.mrb[0].mxu0
      %v402 = vpop.f32.mrb[0].mxu0
      %v403 = vadd.f32 %v216, %v402
      %v404 = vpop.f32.mrb[0].mxu0
      %405 = vmatprep.mubr.bf16.mxu0 0
      %406 = vmatmul.mubr.bf16.gmra.mrb[0].mxu0 %v314
      %v407 = vpop.f32.mrb[0].mxu0
      %v408 = vadd.f32 %v216, %v407
      %v409 = vpop.f32.mrb[0].mxu0
      %v410 = vpop.f32.mrb[0].mxu0
      %v411 = vadd.f32 %v216, %v410
      %v412 = vpop.f32.mrb[0].mxu0
      %413 = vmatprep.mubr.bf16.mxu0 0
      %414 = vmatmul.mubr.bf16.gmra.mrb[0].mxu0 %v317
      %v415 = vpop.f32.mrb[0].mxu0
      %v416 = vadd.f32 %v216, %v415
      %v417 = vpop.f32.mrb[0].mxu0
      %v418 = vpop.f32.mrb[0].mxu0
      %v419 = vadd.f32 %v216, %v418
      %v420 = vpop.f32.mrb[0].mxu0
      %421 = vmatprep.mubr.bf16.mxu0 0
      %422 = vmatmul.mubr.bf16.gmra.mrb[0].mxu0 %v320
      %v423 = vpop.f32.mrb[0].mxu0
      %v424 = vadd.f32 %v216, %v423
      %v425 = vpop.f32.mrb[0].mxu0
      %v426 = vpop.f32.mrb[0].mxu0
      %v427 = vadd.f32 %v216, %v426
      %v428 = vpop.f32.mrb[0].mxu0
      %429 = vmatprep.mubr.bf16.mxu0 0
      %430 = vmatmul.mubr.bf16.gmra.mrb[0].mxu0 %v323
      %v431 = vpop.f32.mrb[0].mxu0
      %v432 = vadd.f32 %v216, %v431
      %v433 = vpop.f32.mrb[0].mxu0
      %v434 = vpop.f32.mrb[0].mxu0
      %v435 = vadd.f32 %v216, %v434
      %v436 = vpop.f32.mrb[0].mxu0
      %437 = vmatprep.mubr.bf16.mxu0 0
      %438 = vmatmul.mubr.bf16.gmra.mrb[0].mxu0 %v326
      %v439 = vpop.f32.mrb[0].mxu0
      %v440 = vadd.f32 %v216, %v439
      %v441 = vpop.f32.mrb[0].mxu0
      %v442 = vpop.f32.mrb[0].mxu0
      %v443 = vadd.f32 %v216, %v442
      %v444 = vpop.f32.mrb[0].mxu0
      %445 = vmatprep.mubr.bf16.mxu0 0
      %446 = vmatmul.mubr.bf16.gmra.mrb[0].mxu0 %v329
      %v447 = vpop.f32.mrb[0].mxu0
      %v448 = vadd.f32 %v216, %v447
      %v449 = vpop.f32.mrb[0].mxu0
      %v450 = vpop.f32.mrb[0].mxu0
      %v451 = vadd.f32 %v216, %v450
      %v452 = vpop.f32.mrb[0].mxu0
      %453 = vmatprep.mubr.bf16.mxu0 0
      %454 = vmatmul.mubr.bf16.gmra.mrb[0].mxu0 %v332
      %v455 = vpop.f32.mrb[0].mxu0
      %v456 = vadd.f32 %v216, %v455
      %v457 = vpop.f32.mrb[0].mxu0
      %v458 = vpop.f32.mrb[0].mxu0
      %v459 = vadd.f32 %v216, %v458
      %v460 = vpop.f32.mrb[0].mxu0
      %461 = vmatprep.mubr.bf16.mxu0 0
      %462 = vmatmul.mubr.bf16.gmra.mrb[0].mxu0 %v335
      %v463 = vpop.f32.mrb[0].mxu0
      %v464 = vadd.f32 %v216, %v463
      %v465 = vpop.f32.mrb[0].mxu0
      %v466 = vpop.f32.mrb[0].mxu0
      %v467 = vadd.f32 %v216, %v466
      %v468 = vpop.f32.mrb[0].mxu0
      %469 = vmatprep.mubr.bf16.mxu0 0
      %470 = vmatmul.mubr.bf16.gmra.mrb[0].mxu0 %v338
      %v471 = vpop.f32.mrb[0].mxu0
      %v472 = vadd.f32 %v216, %v471
      %v473 = vpop.f32.mrb[0].mxu0
      %v474 = vpop.f32.mrb[0].mxu0
      %v475 = vadd.f32 %v216, %v474
      %v476 = vpop.f32.mrb[0].mxu0
      %477 = vmatprep.mubr.bf16.mxu0 0
      %478 = vmatmul.mubr.bf16.gmra.mrb[0].mxu0 %v341
      %v479 = vpop.f32.mrb[0].mxu0
      %v480 = vadd.f32 %v216, %v479
      %v481 = vpop.f32.mrb[0].mxu0
      %v482 = vpop.f32.mrb[0].mxu0
      %v483 = vadd.f32 %v216, %v482
      %v484 = vpop.f32.mrb[0].mxu0
      %485 = vmatprep.mubr.bf16.mxu0 0
      %486 = vmatmul.mubr.bf16.gmra.mrb[0].mxu0 %v344
      %v487 = vpop.f32.mrb[0].mxu0
      %v488 = vadd.f32 %v216, %v487
      %v489 = vpop.f32.mrb[0].mxu0
      %v490 = vpop.f32.mrb[0].mxu0
      %v491 = vadd.f32 %v216, %v490
      %v492 = vpop.f32.mrb[0].mxu0
      %493 = vmatprep.mubr.bf16.mxu0 0
      %494 = vmatmul.mubr.bf16.gmra.mrb[0].mxu0 %v347
      %v495 = vpop.f32.mrb[0].mxu0
      %v496 = vadd.f32 %v216, %v495
      %v497 = vpop.f32.mrb[0].mxu0
      %v498 = vpop.f32.mrb[0].mxu0
      %v499 = vadd.f32 %v216, %v498
      %v500 = vpop.f32.mrb[0].mxu0
      %501 = vmatprep.mubr.bf16.mxu0 0
      %502 = vmatmul.mubr.bf16.gmra.mrb[0].mxu0 %v350
      %v503 = vpop.f32.mrb[0].mxu0
      %v504 = vadd.f32 %v216, %v503
      %v505 = vpop.f32.mrb[0].mxu0
      %v506 = vpop.f32.mrb[0].mxu0
      %v507 = vadd.f32 %v216, %v506
      %v508 = vpop.f32.mrb[0].mxu0
      %509 = vmatprep.mubr.bf16.mxu0 0
      %510 = vmatmul.mubr.bf16.gmra.mrb[0].mxu0 %v353
      %v511 = vpop.f32.mrb[0].mxu0
      %v512 = vadd.f32 %v216, %v511
      %v513 = vpop.f32.mrb[0].mxu0
      %v514 = vpop.f32.mrb[0].mxu0
      %v515 = vadd.f32 %v216, %v514
      %v516 = vpop.f32.mrb[0].mxu0
      %517 = vmatprep.mubr.bf16.mxu0 0
      %518 = vmatmul.mubr.bf16.gmra.mrb[0].mxu0 %v356
      %v519 = vpop.f32.mrb[0].mxu0
      %v520 = vadd.f32 %v216, %v519
      %v521 = vpop.f32.mrb[0].mxu0
      %v522 = vpop.f32.mrb[0].mxu0
      %v523 = vadd.f32 %v216, %v522
      %v524 = vpop.f32.mrb[0].mxu0
      %525 = vdwg.mxu0
      %v526 = vmax.f32 %v400, 0.0
      %v527 = vmax.f32 %v403, 0.0
      %v528 = vmax.f32 %v408, 0.0
      %v529 = vmax.f32 %v411, 0.0
      %v530 = vmax.f32 %v416, 0.0
      %v531 = vmax.f32 %v419, 0.0
      %v532 = vmax.f32 %v424, 0.0
      %v533 = vmax.f32 %v427, 0.0
      %v534 = vmax.f32 %v432, 0.0
      %v535 = vmax.f32 %v435, 0.0
      %v536 = vmax.f32 %v440, 0.0
      %v537 = vmax.f32 %v443, 0.0
      %v538 = vmax.f32 %v448, 0.0
      %v539 = vmax.f32 %v451, 0.0
      %v540 = vmax.f32 %v456, 0.0
      %v541 = vmax.f32 %v459, 0.0
      %v542 = vmax.f32 %v464, 0.0
      %v543 = vmax.f32 %v467, 0.0
      %v544 = vmax.f32 %v472, 0.0
      %v545 = vmax.f32 %v475, 0.0
      %v546 = vmax.f32 %v480, 0.0
      %v547 = vmax.f32 %v483, 0.0
      %v548 = vmax.f32 %v488, 0.0
      %v549 = vmax.f32 %v491, 0.0
      %v550 = vmax.f32 %v496, 0.0
      %v551 = vmax.f32 %v499, 0.0
      %v552 = vmax.f32 %v504, 0.0
      %v553 = vmax.f32 %v507, 0.0
      %v554 = vmax.f32 %v512, 0.0
      %v555 = vmax.f32 %v515, 0.0
      %v556 = vmax.f32 %v520, 0.0
      %v557 = vmax.f32 %v523, 0.0
      %v558 = vmin.f32 %v526, 6.0
      %v559 = vmin.f32 %v527, 6.0
      %v560 = vmin.f32 %v528, 6.0
      %v561 = vmin.f32 %v529, 6.0
      %v562 = vmin.f32 %v530, 6.0
      %v563 = vmin.f32 %v531, 6.0
      %v564 = vmin.f32 %v532, 6.0
      %v565 = vmin.f32 %v533, 6.0
      %v566 = vmin.f32 %v534, 6.0
      %v567 = vmin.f32 %v535, 6.0
      %v568 = vmin.f32 %v536, 6.0
      %v569 = vmin.f32 %v537, 6.0
      %v570 = vmin.f32 %v538, 6.0
      %v571 = vmin.f32 %v539, 6.0
      %v572 = vmin.f32 %v540, 6.0
      %v573 = vmin.f32 %v541, 6.0
      %v574 = vmin.f32 %v542, 6.0
      %v575 = vmin.f32 %v543, 6.0
      %v576 = vmin.f32 %v544, 6.0
      %v577 = vmin.f32 %v545, 6.0
      %v578 = vmin.f32 %v546, 6.0
      %v579 = vmin.f32 %v547, 6.0
      %v580 = vmin.f32 %v548, 6.0
      %v581 = vmin.f32 %v549, 6.0
      %v582 = vmin.f32 %v550, 6.0
      %v583 = vmin.f32 %v551, 6.0
      %v584 = vmin.f32 %v552, 6.0
      %v585 = vmin.f32 %v553, 6.0
      %v586 = vmin.f32 %v554, 6.0
      %v587 = vmin.f32 %v555, 6.0
      %v588 = vmin.f32 %v556, 6.0
      %v589 = vmin.f32 %v557, 6.0
      %v590 = vpack.c.bf16 %v559, %v558
      %v591 = vpack.c.bf16 %v561, %v560
      %v592 = vpack.c.bf16 %v563, %v562
      %v593 = vpack.c.bf16 %v565, %v564
      %v594 = vpack.c.bf16 %v567, %v566
      %v595 = vpack.c.bf16 %v569, %v568
      %v596 = vpack.c.bf16 %v571, %v570
      %v597 = vpack.c.bf16 %v573, %v572
      %v598 = vpack.c.bf16 %v575, %v574
      %v599 = vpack.c.bf16 %v577, %v576
      %v600 = vpack.c.bf16 %v579, %v578
      %v601 = vpack.c.bf16 %v581, %v580
      %v602 = vpack.c.bf16 %v583, %v582
      %v603 = vpack.c.bf16 %v585, %v584
      %v604 = vpack.c.bf16 %v587, %v586
      %v605 = vpack.c.bf16 %v589, %v588
      %v622 = vunpack.c.l.b16 %v590
      %v623 = vunpack.c.h.b16 %v590
      %v624 = vunpack.c.l.b16 %v591
      %v625 = vunpack.c.h.b16 %v591
      %v626 = vunpack.c.l.b16 %v592
      %v627 = vunpack.c.h.b16 %v592
      %v628 = vunpack.c.l.b16 %v593
      %v629 = vunpack.c.h.b16 %v593
      %v630 = vunpack.c.l.b16 %v594
      %v631 = vunpack.c.h.b16 %v594
      %v632 = vunpack.c.l.b16 %v595
      %v633 = vunpack.c.h.b16 %v595
      %v634 = vunpack.c.l.b16 %v596
      %v635 = vunpack.c.h.b16 %v596
      %v636 = vunpack.c.l.b16 %v597
      %v637 = vunpack.c.h.b16 %v597
      %v638 = vunpack.c.l.b16 %v598
      %v639 = vunpack.c.h.b16 %v598
      %v640 = vunpack.c.l.b16 %v599
      %v641 = vunpack.c.h.b16 %v599
      %v642 = vunpack.c.l.b16 %v600
      %v643 = vunpack.c.h.b16 %v600
      %v644 = vunpack.c.l.b16 %v601
      %v645 = vunpack.c.h.b16 %v601
      %v646 = vunpack.c.l.b16 %v602
      %v647 = vunpack.c.h.b16 %v602
      %v648 = vunpack.c.l.b16 %v603
      %v649 = vunpack.c.h.b16 %v603
      %v650 = vunpack.c.l.b16 %v604
      %v651 = vunpack.c.h.b16 %v604
      %v652 = vunpack.c.l.b16 %v605
      %v653 = vunpack.c.h.b16 %v605
      %v654 = vpack.c.b16 %v622, %v622
      %v655 = vpack.c.b16 %v623, %v623
      %v656 = vpack.c.b16 %v624, %v624
      %v657 = vpack.c.b16 %v625, %v625
      %v658 = vpack.c.b16 %v626, %v626
      %v659 = vpack.c.b16 %v627, %v627
      %v660 = vpack.c.b16 %v628, %v628
      %v661 = vpack.c.b16 %v629, %v629
      %v662 = vpack.c.b16 %v630, %v630
      %v663 = vpack.c.b16 %v631, %v631
      %v664 = vpack.c.b16 %v632, %v632
      %v665 = vpack.c.b16 %v633, %v633
      %v666 = vpack.c.b16 %v634, %v634
      %v667 = vpack.c.b16 %v635, %v635
      %v668 = vpack.c.b16 %v636, %v636
      %v669 = vpack.c.b16 %v637, %v637
      %v670 = vpack.c.b16 %v638, %v638
      %v671 = vpack.c.b16 %v639, %v639
      %v672 = vpack.c.b16 %v640, %v640
      %v673 = vpack.c.b16 %v641, %v641
      %v674 = vpack.c.b16 %v642, %v642
      %v675 = vpack.c.b16 %v643, %v643
      %v676 = vpack.c.b16 %v644, %v644
      %v677 = vpack.c.b16 %v645, %v645
      %v678 = vpack.c.b16 %v646, %v646
      %v679 = vpack.c.b16 %v647, %v647
      %v680 = vpack.c.b16 %v648, %v648
      %v681 = vpack.c.b16 %v649, %v649
      %v682 = vpack.c.b16 %v650, %v650
      %v683 = vpack.c.b16 %v651, %v651
      %v684 = vpack.c.b16 %v652, %v652
      %v685 = vpack.c.b16 %v653, %v653
      %vm718 = vcmask 257024
      %719 = vst.msk [vmem:[%s172] sm:$0xf] %vm718, %v654
      %720 = vst.msk [vmem:[%s172 + $0x4] sm:$0xf] %vm718, %v655
      %721 = vst.msk [vmem:[%s172 + $0x8] sm:$0xf] %vm718, %v656
      %722 = vst.msk [vmem:[%s172 + $0xc] sm:$0xf] %vm718, %v657
      %723 = vst.msk [vmem:[%s172 + $0x10] sm:$0xf] %vm718, %v658
      %724 = vst.msk [vmem:[%s172 + $0x14] sm:$0xf] %vm718, %v659
      %725 = vst.msk [vmem:[%s172 + $0x18] sm:$0xf] %vm718, %v660
      %726 = vst.msk [vmem:[%s172 + $0x1c] sm:$0xf] %vm718, %v661
      %727 = vst.msk [vmem:[%s172 + $0x20] sm:$0xf] %vm718, %v662
      %728 = vst.msk [vmem:[%s172 + $0x24] sm:$0xf] %vm718, %v663
      %729 = vst.msk [vmem:[%s172 + $0x28] sm:$0xf] %vm718, %v664
      %730 = vst.msk [vmem:[%s172 + $0x2c] sm:$0xf] %vm718, %v665
      %731 = vst.msk [vmem:[%s172 + $0x30] sm:$0xf] %vm718, %v666
      %732 = vst.msk [vmem:[%s172 + $0x34] sm:$0xf] %vm718, %v667
      %733 = vst.msk [vmem:[%s172 + $0x38] sm:$0xf] %vm718, %v668
      %734 = vst.msk [vmem:[%s172 + $0x3c] sm:$0xf] %vm718, %v669
      %735 = vst.msk [vmem:[%s172 + $0x40] sm:$0xf] %vm718, %v670
      %736 = vst.msk [vmem:[%s172 + $0x44] sm:$0xf] %vm718, %v671
      %737 = vst.msk [vmem:[%s172 + $0x48] sm:$0xf] %vm718, %v672
      %738 = vst.msk [vmem:[%s172 + $0x4c] sm:$0xf] %vm718, %v673
      %739 = vst.msk [vmem:[%s172 + $0x50] sm:$0xf] %vm718, %v674
      %740 = vst.msk [vmem:[%s172 + $0x54] sm:$0xf] %vm718, %v675
      %741 = vst.msk [vmem:[%s172 + $0x58] sm:$0xf] %vm718, %v676
      %742 = vst.msk [vmem:[%s172 + $0x5c] sm:$0xf] %vm718, %v677
      %743 = vst.msk [vmem:[%s172 + $0x60] sm:$0xf] %vm718, %v678
      %744 = vst.msk [vmem:[%s172 + $0x64] sm:$0xf] %vm718, %v679
      %745 = vst.msk [vmem:[%s172 + $0x68] sm:$0xf] %vm718, %v680
      %746 = vst.msk [vmem:[%s172 + $0x6c] sm:$0xf] %vm718, %v681
      %747 = vst.msk [vmem:[%s172 + $0x70] sm:$0xf] %vm718, %v682
      %748 = vst.msk [vmem:[%s172 + $0x74] sm:$0xf] %vm718, %v683
      %749 = vst.msk [vmem:[%s172 + $0x78] sm:$0xf] %vm718, %v684
      %750 = vst.msk [vmem:[%s172 + $0x7c] sm:$0xf] %vm718, %v685
      %s751 = smul.u32 32, %s14
      %p752 = scmp.lt.s32.totalorder %s751, 63
      %s753 = scalar_select %p752, %s751, 63
      %s754 = smul.addr %s753, 4
      %s755 = scalar_lea.vmem %s3, %s754
      // Predicated region
      $region33: #{tpu_custom_call.1} parent=31 // pred_check
        %p756 = pneg %p100
      $region34: #{tpu_custom_call.1} parent=31 // pred_check_branch
        %758 = sbr.rel (%p756) target = $region36
      $region35: #{tpu_custom_call.1} parent=31 // pred_region
        %s759 = smul.u32 32, %s14
      $region36: #{tpu_custom_call.1} parent=31 // pred_fallthru
        _
    $region32: #{tpu_custom_call.1} parent=5 // pred_fallthru
      _
    %p760 = scmp.le.s32.totalorder 2, %s9
    // Predicated region
    $region37: #{tpu_custom_call.1} parent=5 // pred_check
      %p761 = pneg %p760
    $region38: #{tpu_custom_call.1} parent=5 // pred_check_branch
      %763 = sbr.rel (%p761) target = $region40
    $region39: #{tpu_custom_call.1} parent=5 // pred_region
      %s764 = ssub.s32 %s9, 2
      // Predicated region
      $region41: #{tpu_custom_call.1} parent=39 // pred_check
        %p765 = pneg %p106
      $region42: #{tpu_custom_call.1} parent=39 // pred_check_branch
        %767 = sbr.rel (%p765) target = $region44
      $region43: #{tpu_custom_call.1} parent=39 // pred_region
        %s768 = smul.u32 32, %s15
        %p769 = scmp.lt.s32.totalorder %s768, 63
        %s770 = scalar_select %p769, %s768, 63
        %s771 = smul.addr %s770, 4
        %s772 = scalar_lea.vmem %s3, %s771
      $region44: #{tpu_custom_call.1} parent=39 // pred_fallthru
        _
    $region40: #{tpu_custom_call.1} parent=5 // pred_fallthru
      _
  $region6: #{tpu_custom_call.1} parent=0 // loop_footer
    %s13 = sadd.s32 1, %s9
  $region7: #{tpu_custom_call.1} parent=0 // loop_footer_branch
    %8 = sbr.rel target = $region3
  $region8: #{tpu_custom_call.1} parent=0 // loop_exit
    _

</llo_original>
